<compile_context>
chip_gen: v7x
topology: tpu7x:2x2x1
jax: 0.10.0
libtpu: 0.0.40
codegen_flags: <defaults>
</compile_context>

<pallas_src>
import functools

import jax
import jax.numpy as jnp
from jax.experimental import pallas as pl
from jax.experimental.pallas import tpu as pltpu

_VMEM_TILE_BUDGET = 20 * 1024 * 1024   # target per-step working set
_VMEM_LIMIT_BYTES = 40 * 1024 * 1024   # ~2x headroom; < v7x 64 MiB physical


def _output_layer_tag_kernel(x_ref, w1_ref, b1_ref, w2_ref, b2_ref, o_ref):
    # x_ref : (TM, F_in)        native f32, streamed per grid step
    # w1_ref: (F_in, 128)       compute dtype, resident
    # b1_ref: (1, 128)          f32, resident
    # w2_ref: (128, tag_size)   compute dtype, resident
    # b2_ref: (1, tag_size)     f32, resident
    # o_ref : (TM, tag_size)    f32, streamed per grid step
    x = x_ref[...].astype(w1_ref.dtype)            # cast rides free VPU slack
    h = jnp.dot(x, w1_ref[...], preferred_element_type=jnp.float32)
    h = jnp.maximum(h + b1_ref[...], 0.0)          # f32 bias + ReLU epilogue
    # dropout (eval mode) == identity
    h = h.astype(w2_ref.dtype)                     # feed MXU in compute dtype
    out = jnp.dot(h, w2_ref[...], preferred_element_type=jnp.float32)
    o_ref[...] = (out + b2_ref[...]).astype(o_ref.dtype)


def _round_up(n, m):
    return ((n + m - 1) // m) * m


def _pick_tm(F_in, F_pad, tag_size, x_itemsize):
    """Row tile from a per-step VMEM byte budget instead of a fixed row count."""
    lanes_out = _round_up(tag_size, 128)           # out block is lane-padded in VMEM
    per_row = (
        2 * F_in * x_itemsize                      # x tile, double buffered (f32)
        + F_in * 2                                 # in-kernel bf16 copy of x tile
        + F_pad * (4 + 2)                          # hidden tile f32 + bf16 copy
        + 2 * lanes_out * 4                        # out tile, double buffered
    )
    tm = (_VMEM_TILE_BUDGET // per_row) // 8 * 8
    return int(max(512, min(tm, 32768)))


def _wants_core_parallel():
    """Only v7x has 2 TensorCores per chip; elsewhere use plain 'parallel'."""
    try:
        kind = jax.devices()[0].device_kind.lower()
    except Exception:
        return False
    return "v7" in kind


@functools.partial(jax.jit,
                   static_argnames=("compute_dtype", "tm", "core_parallel"))
def _output_layer_tag_impl(x, w1, b1, w2, b2, *, compute_dtype, tm,
                           core_parallel):
    B, S, F_in = x.shape
    F_mid = w1.shape[1]                            # 100
    tag_size = w2.shape[1]
    M = B * S
    out_dtype = x.dtype

    # --- pad hidden dim 100 -> 128 (lane aligned); weights are tiny ----------
    F_pad = _round_up(F_mid, 128)
    pad_h = F_pad - F_mid
    w1p = jnp.pad(w1, ((0, 0), (0, pad_h))).astype(compute_dtype)
    b1p = jnp.pad(b1, ((0, pad_h),)).reshape(1, F_pad).astype(jnp.float32)
    w2p = jnp.pad(w2, ((0, pad_h), (0, 0))).astype(compute_dtype)
    b2p = b2.reshape(1, tag_size).astype(jnp.float32)

    # --- row tiling: x stays in native dtype, no astype / pad HBM pass -------
    x2d = x.reshape(M, F_in)                       # free (row-major bitcast)
    if tm is None:
        tm = _pick_tm(F_in, F_pad, tag_size, x2d.dtype.itemsize)
    tm_eff = max(8, min(tm, _round_up(M, 8)) // 8 * 8)
    grid = (pl.cdiv(M, tm_eff),)                   # partial last tile is masked

    # --- advisory cost estimate ----------------------------------------------
    flops = 2 * M * F_in * F_pad + 2 * M * F_pad * tag_size
    bytes_accessed = (
        x2d.size * x2d.dtype.itemsize
        + w1p.size * w1p.dtype.itemsize + b1p.size * 4
        + w2p.size * w2p.dtype.itemsize + b2p.size * 4
        + M * tag_size * jnp.dtype(out_dtype).itemsize)

    semantics = (pltpu.CORE_PARALLEL,) if core_parallel else ("parallel",)

    out2d = pl.pallas_call(
        _output_layer_tag_kernel,
        out_shape=jax.ShapeDtypeStruct((M, tag_size), out_dtype),
        grid_spec=pltpu.PrefetchScalarGridSpec(
            num_scalar_prefetch=0,
            grid=grid,
            in_specs=[
                pl.BlockSpec((tm_eff, F_in), lambda i: (i, 0)),      # x rows (streamed)
                pl.BlockSpec((F_in, F_pad), lambda i: (0, 0)),       # w1 resident
                pl.BlockSpec((1, F_pad), lambda i: (0, 0)),          # b1 resident
                pl.BlockSpec((F_pad, tag_size), lambda i: (0, 0)),   # w2 resident
                pl.BlockSpec((1, tag_size), lambda i: (0, 0)),       # b2 resident
            ],
            out_specs=pl.BlockSpec((tm_eff, tag_size), lambda i: (i, 0)),
        ),
        compiler_params=pltpu.CompilerParams(
            dimension_semantics=semantics,
            vmem_limit_bytes=_VMEM_LIMIT_BYTES),
        cost_estimate=pl.CostEstimate(
            flops=flops, transcendentals=0, bytes_accessed=bytes_accessed),
    )(x2d, w1p, b1p, w2p, b2p)

    return out2d.reshape(B, S, tag_size)


def output_layer_tag(x, w1, b1, w2, b2, *, compute_dtype=jnp.bfloat16, tm=None):
    """x: (B, S, 2*hidden) f32; weights stored (in, out) == PyTorch W.T."""
    if _wants_core_parallel():
        try:
            return _output_layer_tag_impl(
                x, w1, b1, w2, b2, compute_dtype=compute_dtype, tm=tm,
                core_parallel=True)
        except Exception:
            pass                                   # portable fallback below
    return _output_layer_tag_impl(
        x, w1, b1, w2, b2, compute_dtype=compute_dtype, tm=tm,
        core_parallel=False)


def _reference(x, w1, b1, w2, b2):
    h = jnp.maximum(
        jnp.einsum("bsf,fh->bsh", x, w1,
                   precision=jax.lax.Precision.HIGHEST) + b1, 0.0)
    return jnp.einsum("bsh,ht->bst", h, w2,
                      precision=jax.lax.Precision.HIGHEST) + b2


if __name__ == "__main__":
    # Small deterministic config: hidden=32 -> in_features=64, tag_size=9.
    batch, seq, hidden, tag_size = 2, 8, 32, 9
    f_in, f_mid = 2 * hidden, 100

    key = jax.random.PRNGKey(0)
    kx, kw1, kb1, kw2, kb2 = jax.random.split(key, 5)

    x = jax.random.normal(kx, (batch, seq, f_in), dtype=jnp.float32)
    # Synthetic deterministic params; weights stored (in, out) == PyTorch W.T.
    w1 = jax.random.normal(kw1, (f_in, f_mid), dtype=jnp.float32) * 0.05
    b1 = jax.random.normal(kb1, (f_mid,), dtype=jnp.float32) * 0.01
    w2 = jax.random.normal(kw2, (f_mid, tag_size), dtype=jnp.float32) * 0.05
    b2 = jax.random.normal(kb2, (tag_size,), dtype=jnp.float32) * 0.01

    ref = _reference(x, w1, b1, w2, b2)

    # f32 compute path: tight check of the module semantics.
    out_f32 = jax.block_until_ready(
        output_layer_tag(x, w1, b1, w2, b2, compute_dtype=jnp.float32))
    assert out_f32.shape == (batch, seq, tag_size), out_f32.shape
    assert jnp.allclose(out_f32, ref, atol=1e-4, rtol=1e-4), "f32 mismatch vs reference"

    # bf16 compute path (default, perf mode): loose check.
    out_bf16 = jax.block_until_ready(output_layer_tag(x, w1, b1, w2, b2))
    assert out_bf16.shape == (batch, seq, tag_size), out_bf16.shape
    assert jnp.allclose(out_bf16, ref, atol=5e-2, rtol=5e-2), "bf16 mismatch vs reference"

    # Ragged M (= B*S not a multiple of the row tile): tm=8 forces a 2-step
    # grid whose last tile has one out-of-bounds row, checking that Pallas'
    # partial-tile masking leaks nothing into valid rows.
    xr = jax.random.normal(jax.random.PRNGKey(1), (3, 5, f_in), dtype=jnp.float32)
    ref_r = _reference(xr, w1, b1, w2, b2)
    out_r = jax.block_until_ready(
        output_layer_tag(xr, w1, b1, w2, b2, compute_dtype=jnp.float32, tm=8))
    assert out_r.shape == (3, 5, tag_size), out_r.shape
    assert jnp.allclose(out_r, ref_r, atol=1e-4, rtol=1e-4), "ragged-tile mismatch"

    print("KERNEL_OK")
</pallas_src>

<mosaic_0001>
module attributes {stable_mosaic.version = 11 : i64} {
  func.func @_output_layer_tag_kernel(%arg0: i32, %arg1: memref<16x64xf32, #tpu.memory_space<vmem>>, %arg2: memref<64x128xf32, #tpu.memory_space<vmem>>, %arg3: memref<1x128xf32, #tpu.memory_space<vmem>>, %arg4: memref<128x9xf32, #tpu.memory_space<vmem>>, %arg5: memref<1x9xf32, #tpu.memory_space<vmem>>, %arg6: memref<16x9xf32, #tpu.memory_space<vmem>>) attributes {dimension_semantics = [#tpu.dimension_semantics<parallel>], iteration_bounds = array<i64: 1>, scalar_prefetch = 0 : i64, scratch_operands = 0 : i64, tpu.core_type = #tpu.core_type<tc>, window_params = [{transform_indices = @transform_0, window_bounds = array<i64: 16, 64>}, {pipeline_mode = #tpu.pipeline_mode<synchronous>, transform_indices = @transform_1, window_bounds = array<i64: 64, 128>}, {pipeline_mode = #tpu.pipeline_mode<synchronous>, transform_indices = @transform_2, window_bounds = array<i64: 1, 128>}, {pipeline_mode = #tpu.pipeline_mode<synchronous>, transform_indices = @transform_3, window_bounds = array<i64: 128, 9>}, {pipeline_mode = #tpu.pipeline_mode<synchronous>, transform_indices = @transform_4, window_bounds = array<i64: 1, 9>}, {transform_indices = @transform_5, window_bounds = array<i64: 16, 9>}]} {
    %c0 = arith.constant 0 : index
    %c0_0 = arith.constant 0 : index
    %0 = vector.load %arg1[%c0, %c0_0] : memref<16x64xf32, #tpu.memory_space<vmem>>, vector<16x64xf32>
    %c0_1 = arith.constant 0 : index
    %c0_2 = arith.constant 0 : index
    %1 = vector.load %arg2[%c0_1, %c0_2] : memref<64x128xf32, #tpu.memory_space<vmem>>, vector<64x128xf32>
    %cst = arith.constant dense<0.000000e+00> : vector<16x128xf32>
    %2 = tpu.matmul %0, %1, %cst {dimension_numbers = #tpu.dot_dimension_numbers<[1], [0], [0], [1], [0, 0, 1, 1], [], []>} : vector<16x64xf32>, vector<64x128xf32>, vector<16x128xf32> -> vector<16x128xf32>
    %c0_3 = arith.constant 0 : index
    %c0_4 = arith.constant 0 : index
    %3 = vector.load %arg3[%c0_3, %c0_4] : memref<1x128xf32, #tpu.memory_space<vmem>>, vector<1x128xf32>
    %4 = vector.broadcast %3 : vector<1x128xf32> to vector<16x128xf32>
    %5 = arith.addf %2, %4 : vector<16x128xf32>
    %cst_5 = arith.constant 0.000000e+00 : f32
    %6 = vector.broadcast %cst_5 : f32 to vector<16x128xf32>
    %7 = arith.maximumf %5, %6 : vector<16x128xf32>
    %c0_6 = arith.constant 0 : index
    %c0_7 = arith.constant 0 : index
    %8 = vector.load %arg4[%c0_6, %c0_7] : memref<128x9xf32, #tpu.memory_space<vmem>>, vector<128x9xf32>
    %cst_8 = arith.constant dense<0.000000e+00> : vector<16x9xf32>
    %9 = tpu.matmul %7, %8, %cst_8 {dimension_numbers = #tpu.dot_dimension_numbers<[1], [0], [0], [1], [0, 0, 1, 1], [], []>} : vector<16x128xf32>, vector<128x9xf32>, vector<16x9xf32> -> vector<16x9xf32>
    %c0_9 = arith.constant 0 : index
    %c0_10 = arith.constant 0 : index
    %10 = vector.load %arg5[%c0_9, %c0_10] : memref<1x9xf32, #tpu.memory_space<vmem>>, vector<1x9xf32>
    %11 = vector.broadcast %10 : vector<1x9xf32> to vector<16x9xf32>
    %12 = arith.addf %9, %11 : vector<16x9xf32>
    %c0_11 = arith.constant 0 : index
    %c0_12 = arith.constant 0 : index
    %13 = vector.load %arg6[%c0_11, %c0_12] : memref<16x9xf32, #tpu.memory_space<vmem>>, vector<16x9xf32>
    tpu.vector_store %arg6[%c0_11, %c0_12], %12 {strides = array<i32>} : memref<16x9xf32, #tpu.memory_space<vmem>>, vector<16x9xf32>,
    return
  }
  func.func @transform_0(%arg0: i32) -> (i32, i32) {
    %c0_i32 = arith.constant 0 : i32
    %c0_i32_0 = arith.constant 0 : i32
    return %arg0, %c0_i32 : i32, i32
  }
  func.func @transform_1(%arg0: i32) -> (i32, i32) {
    %c0_i32 = arith.constant 0 : i32
    %c0_i32_0 = arith.constant 0 : i32
    %c0_i32_1 = arith.constant 0 : i32
    return %c0_i32, %c0_i32_0 : i32, i32
  }
  func.func @transform_2(%arg0: i32) -> (i32, i32) {
    %c0_i32 = arith.constant 0 : i32
    %c0_i32_0 = arith.constant 0 : i32
    %c0_i32_1 = arith.constant 0 : i32
    return %c0_i32, %c0_i32_0 : i32, i32
  }
  func.func @transform_3(%arg0: i32) -> (i32, i32) {
    %c0_i32 = arith.constant 0 : i32
    %c0_i32_0 = arith.constant 0 : i32
    %c0_i32_1 = arith.constant 0 : i32
    return %c0_i32, %c0_i32_0 : i32, i32
  }
  func.func @transform_4(%arg0: i32) -> (i32, i32) {
    %c0_i32 = arith.constant 0 : i32
    %c0_i32_0 = arith.constant 0 : i32
    %c0_i32_1 = arith.constant 0 : i32
    return %c0_i32, %c0_i32_0 : i32, i32
  }
  func.func @transform_5(%arg0: i32) -> (i32, i32) {
    %c0_i32 = arith.constant 0 : i32
    %c0_i32_0 = arith.constant 0 : i32
    return %arg0, %c0_i32 : i32, i32
  }
}

</mosaic_0001>

<llo_original>
// kernel: _output_layer_tag_impl.1
$region0: #{_output_layer_tag_impl.1}
  #allocation0 [shape = 'u32[]', space=smem, size = 0x4, offset = 0x4, fixed_abs, tag = 'smem constant byte address 0x4 - core index']
  #allocation1 [shape = 'u32[144,128]{1,0:T(1,128)}', space=vmem, size = 0x12000, scoped, tag = 'internal scratch']
  %s0 = inlined_call_operand.vmem [shape: f32[16,64], index: 0, kind: input, shape index: {}]
  %s1 = inlined_call_operand.vmem [shape: f32[64,128], index: 1, kind: input, shape index: {}]
  %s2 = inlined_call_operand.vmem [shape: f32[1,128], index: 2, kind: input, shape index: {}]
  %s3 = inlined_call_operand.vmem [shape: f32[128,9], index: 3, kind: input, shape index: {}]
  %s4 = inlined_call_operand.vmem [shape: f32[1,9], index: 4, kind: input, shape index: {}]
  %s5 = inlined_call_operand.hbm [shape: f32[16,9], index: 5, kind: output, shape index: {}]
  %s6 = sld [smem:[#allocation0]]
  $region30: #{_output_layer_tag_impl.1} parent=0
    _
  %s8 = ssub.s32 1, %s6
  %s9 = scalar_select 0, %s8, %s6
  $region1: #{_output_layer_tag_impl.1} parent=0
    #allocation2 [shape = 'u8[8192]{0}', space=vmem, size = 0x2000, scoped, tag = 'output window, operand 0, single buffered']
    #allocation3 [shape = 's32[1]{0}', space=sflag, size = 0x4, scoped, tag = 'scoped memory for _output_layer_tag_impl.1']
    %10 = vsyncpa [#allocation3], 0
    // Predicated region
    $region2: #{_output_layer_tag_impl.1} parent=1 // pred_check
      _
    $region3: #{_output_layer_tag_impl.1} parent=1 // pred_check_branch
      %12 = sbr.rel (0) target = $region5
    $region4: #{_output_layer_tag_impl.1} parent=1 // pred_region
      _
    $region5: #{_output_layer_tag_impl.1} parent=1 // pred_fallthru
      _
    // Predicated region
    $region6: #{_output_layer_tag_impl.1} parent=1 // pred_check
      _
    $region7: #{_output_layer_tag_impl.1} parent=1 // pred_check_branch
      %14 = sbr.rel (0) target = $region9
    $region8: #{_output_layer_tag_impl.1} parent=1 // pred_region
      _
    $region9: #{_output_layer_tag_impl.1} parent=1 // pred_fallthru
      _
    // Predicated region
    $region10: #{_output_layer_tag_impl.1} parent=1 // pred_check
      _
    $region11: #{_output_layer_tag_impl.1} parent=1 // pred_check_branch
      %16 = sbr.rel (0) target = $region13
    $region12: #{_output_layer_tag_impl.1} parent=1 // pred_region
      _
    $region13: #{_output_layer_tag_impl.1} parent=1 // pred_fallthru
      _
    // Predicated region
    $region14: #{_output_layer_tag_impl.1} parent=1 // pred_check
      _
    $region15: #{_output_layer_tag_impl.1} parent=1 // pred_check_branch
      %18 = sbr.rel (0) target = $region17
    $region16: #{_output_layer_tag_impl.1} parent=1 // pred_region
      _
    $region17: #{_output_layer_tag_impl.1} parent=1 // pred_fallthru
      _
    // Predicated region
    $region18: #{_output_layer_tag_impl.1} parent=1 // pred_check
      _
    $region19: #{_output_layer_tag_impl.1} parent=1 // pred_check_branch
      %20 = sbr.rel (0) target = $region21
    $region20: #{_output_layer_tag_impl.1} parent=1 // pred_region
      _
    $region21: #{_output_layer_tag_impl.1} parent=1 // pred_fallthru
      _
    %v21 = vld [vmem:[%s0] sm:$0xff]
    %v22 = vld [vmem:[%s0 + $0x8] sm:$0xff]
    %v23 = vld [vmem:[%s1] sm:$0xff]
    %v24 = vld [vmem:[%s1 + $0x8] sm:$0xff]
    %v25 = vld [vmem:[%s1 + $0x10] sm:$0xff]
    %v26 = vld [vmem:[%s1 + $0x18] sm:$0xff]
    %v27 = vld [vmem:[%s1 + $0x20] sm:$0xff]
    %v28 = vld [vmem:[%s1 + $0x28] sm:$0xff]
    %v29 = vld [vmem:[%s1 + $0x30] sm:$0xff]
    %v30 = vld [vmem:[%s1 + $0x38] sm:$0xff]
    %v31 = vld [vmem:[%s2] sm:$0x1]
    %v33 = vlaneseq
    %v34 = vshrl.u32 %v33, 7
    %v35 = vsub.s32 0, %v34
    %v36 = vrot.slane %v31, %v35
    %vm38 = vcmask 523264
    %v40 = vsel %vm38, %v21, 0
    %v43 = vsel %vm38, %v22, 0
    %45 = vmatprep.subr.mxu0 0.0
    %46 = vmatpush1.msra.mxu0 %v23
    %47 = vmatprep.subr.mxu0 0.0
    %48 = vmatpush1.msra.mxu0 %v24
    %49 = vmatprep.subr.mxu0 0.0
    %50 = vmatpush1.msra.mxu0 %v25
    %51 = vmatprep.subr.mxu0 0.0
    %52 = vmatpush1.msra.mxu0 %v26
    %53 = vmatprep.subr.mxu0 0.0
    %54 = vmatpush1.msra.mxu0 %v27
    %55 = vmatprep.subr.mxu0 0.0
    %56 = vmatpush1.msra.mxu0 %v28
    %57 = vmatprep.subr.mxu0 0.0
    %58 = vmatpush1.msra.mxu0 %v29
    %59 = vmatprep.subr.mxu0 0.0
    %60 = vmatpush1.msra.mxu0 %v30
    %61 = vmatprep.subr.mxu0 0.0
    %62 = vmatpush1.msra.mxu0 0.0
    %63 = vmatprep.subr.mxu0 0.0
    %64 = vmatpush1.msra.mxu0 0.0
    %65 = vmatprep.subr.mxu0 0.0
    %66 = vmatpush1.msra.mxu0 0.0
    %67 = vmatprep.subr.mxu0 0.0
    %68 = vmatpush1.msra.mxu0 0.0
    %69 = vmatprep.subr.mxu0 0.0
    %70 = vmatpush1.msra.mxu0 0.0
    %71 = vmatprep.subr.mxu0 0.0
    %72 = vmatpush1.msra.mxu0 0.0
    %73 = vmatprep.subr.mxu0 0.0
    %74 = vmatpush1.msra.mxu0 0.0
    %75 = vmatprep.subr.mxu0 0.0
    %76 = vmatpush1.msra.mxu0 0.0
    %77 = vmatprep.subr.mxu0 0.0
    %78 = vmatpush1.msra.mxu0 0.0
    %79 = vmatprep.subr.mxu0 0.0
    %80 = vmatpush1.msra.mxu0 0.0
    %81 = vmatprep.subr.mxu0 0.0
    %82 = vmatpush1.msra.mxu0 0.0
    %83 = vmatprep.subr.mxu0 0.0
    %84 = vmatpush1.msra.mxu0 0.0
    %85 = vmatprep.subr.mxu0 0.0
    %86 = vmatpush1.msra.mxu0 0.0
    %87 = vmatprep.subr.mxu0 0.0
    %88 = vmatpush1.msra.mxu0 0.0
    %89 = vmatprep.subr.mxu0 0.0
    %90 = vmatpush1.msra.mxu0 0.0
    %91 = vmatprep.subr.mxu0 0.0
    %92 = vmatpush1.msra.mxu0 0.0
    %93 = vmatprep.subr.mxu0 0.0
    %94 = vmatpush1.msra.mxu0 0.0
    %95 = vmatprep.subr.mxu0 0.0
    %96 = vmatpush1.msra.mxu0 0.0
    %97 = vmatprep.subr.mxu0 0.0
    %98 = vmatpush1.msra.mxu0 0.0
    %99 = vmatprep.subr.mxu0 0.0
    %100 = vmatpush1.msra.mxu0 0.0
    %101 = vmatprep.subr.mxu0 0.0
    %102 = vmatpush1.msra.mxu0 0.0
    %103 = vmatprep.subr.mxu0 0.0
    %104 = vmatpush1.msra.mxu0 0.0
    %105 = vmatprep.subr.mxu0 0.0
    %106 = vmatpush1.msra.mxu0 0.0
    %107 = vmatprep.subr.mxu0 0.0
    %108 = vmatpush1.msra.mxu0 0.0
    %109 = vmatprep.mubr.f32.mxu0 0.0
    %110 = vmatmul.mubr.f32.gmra.mrb[0].mxu0 %v40
    %v111 = vpop.f32.mrb[0].mxu0
    %v112 = vadd.f32 %v36, %v111
    %v113 = vpop.f32.mrb[0].mxu0
    %114 = vmatprep.mubr.f32.mxu0 0.0
    %115 = vmatmul.mubr.f32.gmra.mrb[0].mxu0 %v43
    %v116 = vpop.f32.mrb[0].mxu0
    %v117 = vadd.f32 %v36, %v116
    %v118 = vpop.f32.mrb[0].mxu0
    %119 = vdwg.mxu0
    %v120 = vmax.f32 %v112, 0.0
    %v121 = vmax.f32 %v117, 0.0
    %v122 = vld [vmem:[%s3] sm:$0xff]
    %v123 = vld [vmem:[%s3 + $0x8] sm:$0xff]
    %v124 = vld [vmem:[%s3 + $0x10] sm:$0xff]
    %v125 = vld [vmem:[%s3 + $0x18] sm:$0xff]
    %v126 = vld [vmem:[%s3 + $0x20] sm:$0xff]
    %v127 = vld [vmem:[%s3 + $0x28] sm:$0xff]
    %v128 = vld [vmem:[%s3 + $0x30] sm:$0xff]
    %v129 = vld [vmem:[%s3 + $0x38] sm:$0xff]
    %v130 = vld [vmem:[%s3 + $0x40] sm:$0xff]
    %v131 = vld [vmem:[%s3 + $0x48] sm:$0xff]
    %v132 = vld [vmem:[%s3 + $0x50] sm:$0xff]
    %v133 = vld [vmem:[%s3 + $0x58] sm:$0xff]
    %v134 = vld [vmem:[%s3 + $0x60] sm:$0xff]
    %v135 = vld [vmem:[%s3 + $0x68] sm:$0xff]
    %v136 = vld [vmem:[%s3 + $0x70] sm:$0xff]
    %v137 = vld [vmem:[%s3 + $0x78] sm:$0xff]
    %v138 = vld [vmem:[%s4] sm:$0x1]
    %v140 = vlaneseq
    %v141 = vshrl.u32 %v140, 7
    %v142 = vsub.s32 0, %v141
    %v143 = vrot.slane %v138, %v142
    %145 = vmatprep.subr.mxu0 0.0
    %146 = vmatpush1.msra.mxu0 %v122
    %147 = vmatprep.subr.mxu0 0.0
    %148 = vmatpush1.msra.mxu0 %v123
    %149 = vmatprep.subr.mxu0 0.0
    %150 = vmatpush1.msra.mxu0 %v124
    %151 = vmatprep.subr.mxu0 0.0
    %152 = vmatpush1.msra.mxu0 %v125
    %153 = vmatprep.subr.mxu0 0.0
    %154 = vmatpush1.msra.mxu0 %v126
    %155 = vmatprep.subr.mxu0 0.0
    %156 = vmatpush1.msra.mxu0 %v127
    %157 = vmatprep.subr.mxu0 0.0
    %158 = vmatpush1.msra.mxu0 %v128
    %159 = vmatprep.subr.mxu0 0.0
    %160 = vmatpush1.msra.mxu0 %v129
    %161 = vmatprep.subr.mxu0 0.0
    %162 = vmatpush1.msra.mxu0 %v130
    %163 = vmatprep.subr.mxu0 0.0
    %164 = vmatpush1.msra.mxu0 %v131
    %165 = vmatprep.subr.mxu0 0.0
    %166 = vmatpush1.msra.mxu0 %v132
    %167 = vmatprep.subr.mxu0 0.0
    %168 = vmatpush1.msra.mxu0 %v133
    %169 = vmatprep.subr.mxu0 0.0
    %170 = vmatpush1.msra.mxu0 %v134
    %171 = vmatprep.subr.mxu0 0.0
    %172 = vmatpush1.msra.mxu0 %v135
    %173 = vmatprep.subr.mxu0 0.0
    %174 = vmatpush1.msra.mxu0 %v136
    %175 = vmatprep.subr.mxu0 0.0
    %176 = vmatpush1.msra.mxu0 %v137
    %177 = vmatprep.subr.mxu0 0.0
    %178 = vmatpush1.msra.mxu0 0.0
    %179 = vmatprep.subr.mxu0 0.0
    %180 = vmatpush1.msra.mxu0 0.0
    %181 = vmatprep.subr.mxu0 0.0
    %182 = vmatpush1.msra.mxu0 0.0
    %183 = vmatprep.subr.mxu0 0.0
    %184 = vmatpush1.msra.mxu0 0.0
    %185 = vmatprep.subr.mxu0 0.0
    %186 = vmatpush1.msra.mxu0 0.0
    %187 = vmatprep.subr.mxu0 0.0
    %188 = vmatpush1.msra.mxu0 0.0
    %189 = vmatprep.subr.mxu0 0.0
    %190 = vmatpush1.msra.mxu0 0.0
    %191 = vmatprep.subr.mxu0 0.0
    %192 = vmatpush1.msra.mxu0 0.0
    %193 = vmatprep.subr.mxu0 0.0
    %194 = vmatpush1.msra.mxu0 0.0
    %195 = vmatprep.subr.mxu0 0.0
    %196 = vmatpush1.msra.mxu0 0.0
    %197 = vmatprep.subr.mxu0 0.0
    %198 = vmatpush1.msra.mxu0 0.0
    %199 = vmatprep.subr.mxu0 0.0
    %200 = vmatpush1.msra.mxu0 0.0
    %201 = vmatprep.subr.mxu0 0.0
    %202 = vmatpush1.msra.mxu0 0.0
    %203 = vmatprep.subr.mxu0 0.0
    %204 = vmatpush1.msra.mxu0 0.0
    %205 = vmatprep.subr.mxu0 0.0
    %206 = vmatpush1.msra.mxu0 0.0
    %207 = vmatprep.subr.mxu0 0.0
    %208 = vmatpush1.msra.mxu0 0.0
    %209 = vmatprep.mubr.f32.mxu0 0.0
    %210 = vmatmul.mubr.f32.gmra.mrb[0].mxu0 %v120
    %v211 = vpop.f32.mrb[0].mxu0
    %v212 = vadd.f32 %v143, %v211
    %v213 = vpop.f32.mrb[0].mxu0
    %214 = vmatprep.mubr.f32.mxu0 0.0
    %215 = vmatmul.mubr.f32.gmra.mrb[0].mxu0 %v121
    %v216 = vpop.f32.mrb[0].mxu0
    %v217 = vadd.f32 %v143, %v216
    %v218 = vpop.f32.mrb[0].mxu0
    %219 = vdwg.mxu0
    %vm220 = vcmask 72704
    %221 = vst.msk [vmem:[#allocation2] sm:$0xff] %vm220, %v212
    %222 = vst.msk [vmem:[#allocation2 + $0x8] sm:$0xff] %vm220, %v217
    // Predicated region
    $region22: #{_output_layer_tag_impl.1} parent=1 // pred_check
      _
    $region23: #{_output_layer_tag_impl.1} parent=1 // pred_check_branch
      %224 = sbr.rel (0) target = $region25
    $region24: #{_output_layer_tag_impl.1} parent=1 // pred_region
      %s226 = ssub.s32 256, 256
      %227 = vsyncadd [#allocation3], %s226
      %s228 = sshll.u32 [#allocation2], 4
      %s229 = int_to_ptr.vmem [resolvable:$true] %s228
      %234 = dma.vmem_to_hbm [thread:$0]  %s229, 256, %s5, [#allocation3], 128, 128, 8
    $region25: #{_output_layer_tag_impl.1} parent=1 // pred_fallthru
      _
    // Predicated region
    $region26: #{_output_layer_tag_impl.1} parent=1 // pred_check
      _
    $region27: #{_output_layer_tag_impl.1} parent=1 // pred_check_branch
      %236 = sbr.rel (0) target = $region29
    $region28: #{_output_layer_tag_impl.1} parent=1 // pred_region
      %237 = dma.done [#allocation3], 256
    $region29: #{_output_layer_tag_impl.1} parent=1 // pred_fallthru
      _
    %238 = vsyncpa [#allocation3], 1

</llo_original>
